<compile_context>
chip_gen: v5e
topology: v5e:2x2
jax: 0.10.0
libtpu: 0.0.40
codegen_flags: <defaults>
</compile_context>

<pallas_src>
import jax
import jax.numpy as jnp
from jax.experimental import pallas as pl
from jax.experimental.pallas import tpu as pltpu


def _round_up(x, m):
    return ((x + m - 1) // m) * m


def _preferred_compute_dtype():
    """bf16 is the native MXU dtype on recent TPUs; f32 matmul is multi-pass emulation.
    Auto-select bf16 on v6e/v7x (accumulation stays f32 via preferred_element_type)."""
    try:
        kind = jax.devices()[0].device_kind.lower()
    except Exception:
        return jnp.float32
    if ("v6" in kind) or ("v7" in kind) or ("7x" in kind):
        return jnp.bfloat16
    return jnp.float32


def mlp_kernel(x_ref, w1_ref, b1_ref, w2_ref, b2_ref, w3_ref, b3_ref, o_ref):
    # Layer 1: (TB, F) @ (F, H1p).  MXU under-fills K=F (tiny work); f32 accumulation;
    # bias-add/ReLU epilogue stays f32 so v5e (no bf16 VPU) is safe too.
    h1 = jnp.dot(x_ref[...], w1_ref[...], preferred_element_type=jnp.float32)
    h1 = jnp.maximum(h1 + b1_ref[...], 0.0)
    # Layer 2: (TB, H1p) @ (H1p, H2p).
    h2 = jnp.dot(h1.astype(w2_ref.dtype), w2_ref[...], preferred_element_type=jnp.float32)
    h2 = jnp.maximum(h2 + b2_ref[...], 0.0)
    # Layer 3 on the MXU (w3 padded to 128 output lanes); only the real lanes are written
    # back, so the output DMA is (TB, 1) instead of (TB, 128).
    out = jnp.dot(h2.astype(w3_ref.dtype), w3_ref[...], preferred_element_type=jnp.float32)
    n_out = o_ref.shape[-1]
    o_ref[...] = (out[:, :n_out] + b3_ref[...]).astype(o_ref.dtype)


def prepare_params(params, compute_dtype=None):
    """Pad & cast weights/biases ONCE (call outside the training/inference loop).

    Weights are stored (in, out) so the kernel computes y = x @ W + b on the MXU.
    Hidden dims are zero-padded to multiples of 128 (numerically exact: ReLU(0)=0 and
    zero weights contribute nothing); the output dim is padded to 128 only inside w3 so
    the MXU shape is legal -- the kernel stores just the real output lanes.
    """
    if compute_dtype is None:
        compute_dtype = _preferred_compute_dtype()
    w1, b1, w2, b2, w3, b3 = params
    F, H1 = w1.shape
    H2 = w2.shape[1]
    OUT = w3.shape[1]
    H1p = _round_up(H1, 128)                 # 200 -> 256
    H2p = _round_up(H2, 128)                 # 400 -> 512
    OUTp = _round_up(max(OUT, 128), 128)     # 1   -> 128 (MXU-legal; output NOT padded)
    f32 = jnp.float32
    w1p = jnp.zeros((F, H1p), compute_dtype).at[:, :H1].set(w1.astype(compute_dtype))
    w2p = jnp.zeros((H1p, H2p), compute_dtype).at[:H1, :H2].set(w2.astype(compute_dtype))
    w3p = jnp.zeros((H2p, OUTp), compute_dtype).at[:H2, :OUT].set(w3.astype(compute_dtype))
    # Biases stay f32: the bias-add/ReLU epilogues run in f32 on every chip generation.
    b1p = jnp.zeros((1, H1p), f32).at[:, :H1].set(b1.reshape(1, H1).astype(f32))
    b2p = jnp.zeros((1, H2p), f32).at[:, :H2].set(b2.reshape(1, H2).astype(f32))
    b3p = b3.reshape(1, OUT).astype(f32)     # unpadded: added after the lane slice
    return {"w1": w1p, "b1": b1p, "w2": w2p, "b2": b2p, "w3": w3p, "b3": b3p,
            "out_features": OUT, "compute_dtype": compute_dtype}


def linear_regression_model(x, prepared, *, block_b=1024):
    """Forward pass of the 3-layer MLP as a batch-tiled Pallas kernel."""
    w1p, b1p = prepared["w1"], prepared["b1"]
    w2p, b2p = prepared["w2"], prepared["b2"]
    w3p, b3p = prepared["w3"], prepared["b3"]
    OUT = prepared["out_features"]
    compute_dtype = prepared["compute_dtype"]

    B, F = x.shape
    assert w1p.shape[0] == F, "input feature dim mismatch with prepared params"
    H1p, H2p, OUTp = w1p.shape[1], w2p.shape[1], w3p.shape[1]

    # Batch tile.  No batch padding: the last tile may be ragged; rows are independent so
    # the OOB rows of the final block never affect written-back rows.
    TB = min(block_b, _round_up(max(B, 8), 8))
    # v7x has 2 TensorCores: keep >=2 batch tiles on large batches so the "parallel" batch
    # axis can shard across both (no-op on single-TC v5e/v6e).
    if B >= 1024 and pl.cdiv(B, TB) < 2:
        TB = _round_up(pl.cdiv(B, 2), 8)
    grid = (pl.cdiv(B, TB),)

    x = x.astype(compute_dtype)

    dsize = jnp.dtype(compute_dtype).itemsize
    flops = 2 * B * (F * H1p + H1p * H2p + H2p * OUTp)
    bytes_accessed = (
        x.size * dsize
        + (w1p.size + w2p.size + w3p.size) * dsize
        + (b1p.size + b2p.size + b3p.size) * 4
        + B * OUT * 4
    )

    resident = lambda i: (0, 0)   # same block every step -> weights stay VMEM-resident

    return pl.pallas_call(
        mlp_kernel,
        out_shape=jax.ShapeDtypeStruct((B, OUT), jnp.float32),
        grid_spec=pltpu.PrefetchScalarGridSpec(
            num_scalar_prefetch=0,
            grid=grid,
            in_specs=[
                pl.BlockSpec((TB, F), lambda i: (i, 0)),   # x: batch-tiled, unpadded F
                pl.BlockSpec((F, H1p), resident),
                pl.BlockSpec((1, H1p), resident),
                pl.BlockSpec((H1p, H2p), resident),
                pl.BlockSpec((1, H2p), resident),
                pl.BlockSpec((H2p, OUTp), resident),
                pl.BlockSpec((1, OUT), resident),
            ],
            out_specs=pl.BlockSpec((TB, OUT), lambda i: (i, 0)),   # narrow (B,1) writeback
        ),
        compiler_params=pltpu.CompilerParams(
            # Batch tiles are independent -> shard across both TCs on v7x.
            dimension_semantics=("parallel",),
            # Explicit limit: headroom for block_b sweeps, safe on v5e/v6e/v7x.
            vmem_limit_bytes=32 * 1024 * 1024,
        ),
        cost_estimate=pl.CostEstimate(
            flops=flops, transcendentals=0, bytes_accessed=bytes_accessed),
    )(x, w1p, b1p, w2p, b2p, w3p, b3p)


def init_linear_params(key, fan_in, fan_out):
    """Mimics PyTorch nn.Linear default init: U(-1/sqrt(fan_in), 1/sqrt(fan_in))."""
    kw, kb = jax.random.split(key)
    bound = 1.0 / jnp.sqrt(float(fan_in))
    w = jax.random.uniform(kw, (fan_in, fan_out), jnp.float32, -bound, bound)  # (in, out)
    b = jax.random.uniform(kb, (1, fan_out), jnp.float32, -bound, bound)
    return w, b


def _reference(x, params):
    w1, b1, w2, b2, w3, b3 = params
    h = jnp.maximum(x @ w1 + b1, 0.0)
    h = jnp.maximum(h @ w2 + b2, 0.0)
    return h @ w3 + b3


if __name__ == "__main__":
    key = jax.random.PRNGKey(0)
    k_x, k_x2, k1, k2, k3 = jax.random.split(key, 5)

    input_size = 8     # stand-in for X_train.shape[1]
    output_size = 1

    w1, b1 = init_linear_params(k1, input_size, 200)
    w2, b2 = init_linear_params(k2, 200, 400)
    w3, b3 = init_linear_params(k3, 400, output_size)
    params = (w1, b1, w2, b2, w3, b3)

    # Pad/cast weights once, OUTSIDE the per-call path (avoids per-forward re-padding).
    prep_f32 = prepare_params(params, compute_dtype=jnp.float32)
    prep_bf16 = prepare_params(params, compute_dtype=jnp.bfloat16)

    # --- small-batch f32 check (matches PyTorch semantics exactly) ---
    batch = 2
    x = jax.random.normal(k_x, (batch, input_size), jnp.float32)
    out = jax.block_until_ready(linear_regression_model(x, prep_f32))
    ref = _reference(x, params)
    assert out.shape == (batch, output_size)
    assert jnp.allclose(out, ref, atol=1e-3, rtol=1e-3)

    # --- multi-tile ragged batch (exercises cdiv grid + masked final tile + (B,1) store) ---
    batch2 = 300
    x2 = jax.random.normal(k_x2, (batch2, input_size), jnp.float32)
    out2 = jax.block_until_ready(linear_regression_model(x2, prep_f32, block_b=128))
    ref2 = _reference(x2, params)
    assert out2.shape == (batch2, output_size)
    assert jnp.allclose(out2, ref2, atol=1e-3, rtol=1e-3)

    # --- bf16 compute path (native MXU dtype on v5e/v6e/v7x; f32 accumulation) ---
    out_bf16 = jax.block_until_ready(linear_regression_model(x2, prep_bf16, block_b=128))
    assert out_bf16.shape == (batch2, output_size)
    assert jnp.allclose(out_bf16, ref2, atol=1e-1, rtol=1e-1)

    print("KERNEL_OK")
</pallas_src>

<mosaic_0001>
module attributes {stable_mosaic.version = 11 : i64} {
  func.func @mlp_kernel(%arg0: i32, %arg1: memref<8x8xf32, #tpu.memory_space<vmem>>, %arg2: memref<8x256xf32, #tpu.memory_space<vmem>>, %arg3: memref<1x256xf32, #tpu.memory_space<vmem>>, %arg4: memref<256x512xf32, #tpu.memory_space<vmem>>, %arg5: memref<1x512xf32, #tpu.memory_space<vmem>>, %arg6: memref<512x128xf32, #tpu.memory_space<vmem>>, %arg7: memref<1x1xf32, #tpu.memory_space<vmem>>, %arg8: memref<8x1xf32, #tpu.memory_space<vmem>>) attributes {dimension_semantics = [#tpu.dimension_semantics<parallel>], iteration_bounds = array<i64: 1>, scalar_prefetch = 0 : i64, scratch_operands = 0 : i64, tpu.core_type = #tpu.core_type<tc>, window_params = [{transform_indices = @transform_0, window_bounds = array<i64: 8, 8>}, {pipeline_mode = #tpu.pipeline_mode<synchronous>, transform_indices = @transform_1, window_bounds = array<i64: 8, 256>}, {pipeline_mode = #tpu.pipeline_mode<synchronous>, transform_indices = @transform_2, window_bounds = array<i64: 1, 256>}, {pipeline_mode = #tpu.pipeline_mode<synchronous>, transform_indices = @transform_3, window_bounds = array<i64: 256, 512>}, {pipeline_mode = #tpu.pipeline_mode<synchronous>, transform_indices = @transform_4, window_bounds = array<i64: 1, 512>}, {pipeline_mode = #tpu.pipeline_mode<synchronous>, transform_indices = @transform_5, window_bounds = array<i64: 512, 128>}, {pipeline_mode = #tpu.pipeline_mode<synchronous>, transform_indices = @transform_6, window_bounds = array<i64: 1, 1>}, {transform_indices = @transform_7, window_bounds = array<i64: 8, 1>}]} {
    %c0 = arith.constant 0 : index
    %c0_0 = arith.constant 0 : index
    %0 = vector.load %arg1[%c0, %c0_0] : memref<8x8xf32, #tpu.memory_space<vmem>>, vector<8x8xf32>
    %c0_1 = arith.constant 0 : index
    %c0_2 = arith.constant 0 : index
    %1 = vector.load %arg2[%c0_1, %c0_2] : memref<8x256xf32, #tpu.memory_space<vmem>>, vector<8x256xf32>
    %cst = arith.constant dense<0.000000e+00> : vector<8x256xf32>
    %2 = tpu.matmul %0, %1, %cst {dimension_numbers = #tpu.dot_dimension_numbers<[1], [0], [0], [1], [0, 0, 1, 1], [], []>} : vector<8x8xf32>, vector<8x256xf32>, vector<8x256xf32> -> vector<8x256xf32>
    %c0_3 = arith.constant 0 : index
    %c0_4 = arith.constant 0 : index
    %3 = vector.load %arg3[%c0_3, %c0_4] : memref<1x256xf32, #tpu.memory_space<vmem>>, vector<1x256xf32>
    %4 = vector.broadcast %3 : vector<1x256xf32> to vector<8x256xf32>
    %5 = arith.addf %2, %4 : vector<8x256xf32>
    %cst_5 = arith.constant 0.000000e+00 : f32
    %6 = vector.broadcast %cst_5 : f32 to vector<8x256xf32>
    %7 = arith.maximumf %5, %6 : vector<8x256xf32>
    %c0_6 = arith.constant 0 : index
    %c0_7 = arith.constant 0 : index
    %8 = vector.load %arg4[%c0_6, %c0_7] : memref<256x512xf32, #tpu.memory_space<vmem>>, vector<256x512xf32>
    %cst_8 = arith.constant dense<0.000000e+00> : vector<8x512xf32>
    %9 = tpu.matmul %7, %8, %cst_8 {dimension_numbers = #tpu.dot_dimension_numbers<[1], [0], [0], [1], [0, 0, 1, 1], [], []>} : vector<8x256xf32>, vector<256x512xf32>, vector<8x512xf32> -> vector<8x512xf32>
    %c0_9 = arith.constant 0 : index
    %c0_10 = arith.constant 0 : index
    %10 = vector.load %arg5[%c0_9, %c0_10] : memref<1x512xf32, #tpu.memory_space<vmem>>, vector<1x512xf32>
    %11 = vector.broadcast %10 : vector<1x512xf32> to vector<8x512xf32>
    %12 = arith.addf %9, %11 : vector<8x512xf32>
    %cst_11 = arith.constant 0.000000e+00 : f32
    %13 = vector.broadcast %cst_11 : f32 to vector<8x512xf32>
    %14 = arith.maximumf %12, %13 : vector<8x512xf32>
    %c0_12 = arith.constant 0 : index
    %c0_13 = arith.constant 0 : index
    %15 = vector.load %arg6[%c0_12, %c0_13] : memref<512x128xf32, #tpu.memory_space<vmem>>, vector<512x128xf32>
    %cst_14 = arith.constant dense<0.000000e+00> : vector<8x128xf32>
    %16 = tpu.matmul %14, %15, %cst_14 {dimension_numbers = #tpu.dot_dimension_numbers<[1], [0], [0], [1], [0, 0, 1, 1], [], []>} : vector<8x512xf32>, vector<512x128xf32>, vector<8x128xf32> -> vector<8x128xf32>
    %17 = vector.extract_strided_slice %16 {offsets = [0, 0], sizes = [8, 1], strides = [1, 1]} : vector<8x128xf32> to vector<8x1xf32>
    %c0_15 = arith.constant 0 : index
    %c0_16 = arith.constant 0 : index
    %18 = vector.load %arg7[%c0_15, %c0_16] : memref<1x1xf32, #tpu.memory_space<vmem>>, vector<1x1xf32>
    %19 = vector.broadcast %18 : vector<1x1xf32> to vector<8x1xf32>
    %20 = arith.addf %17, %19 : vector<8x1xf32>
    %c0_17 = arith.constant 0 : index
    %c0_18 = arith.constant 0 : index
    %21 = vector.load %arg8[%c0_17, %c0_18] : memref<8x1xf32, #tpu.memory_space<vmem>>, vector<8x1xf32>
    tpu.vector_store %arg8[%c0_17, %c0_18], %20 {strides = array<i32>} : memref<8x1xf32, #tpu.memory_space<vmem>>, vector<8x1xf32>,
    return
  }
  func.func @transform_0(%arg0: i32) -> (i32, i32) {
    %c0_i32 = arith.constant 0 : i32
    %c0_i32_0 = arith.constant 0 : i32
    return %arg0, %c0_i32 : i32, i32
  }
  func.func @transform_1(%arg0: i32) -> (i32, i32) {
    %c0_i32 = arith.constant 0 : i32
    %c0_i32_0 = arith.constant 0 : i32
    %c0_i32_1 = arith.constant 0 : i32
    return %c0_i32, %c0_i32_0 : i32, i32
  }
  func.func @transform_2(%arg0: i32) -> (i32, i32) {
    %c0_i32 = arith.constant 0 : i32
    %c0_i32_0 = arith.constant 0 : i32
    %c0_i32_1 = arith.constant 0 : i32
    return %c0_i32, %c0_i32_0 : i32, i32
  }
  func.func @transform_3(%arg0: i32) -> (i32, i32) {
    %c0_i32 = arith.constant 0 : i32
    %c0_i32_0 = arith.constant 0 : i32
    %c0_i32_1 = arith.constant 0 : i32
    return %c0_i32, %c0_i32_0 : i32, i32
  }
  func.func @transform_4(%arg0: i32) -> (i32, i32) {
    %c0_i32 = arith.constant 0 : i32
    %c0_i32_0 = arith.constant 0 : i32
    %c0_i32_1 = arith.constant 0 : i32
    return %c0_i32, %c0_i32_0 : i32, i32
  }
  func.func @transform_5(%arg0: i32) -> (i32, i32) {
    %c0_i32 = arith.constant 0 : i32
    %c0_i32_0 = arith.constant 0 : i32
    %c0_i32_1 = arith.constant 0 : i32
    return %c0_i32, %c0_i32_0 : i32, i32
  }
  func.func @transform_6(%arg0: i32) -> (i32, i32) {
    %c0_i32 = arith.constant 0 : i32
    %c0_i32_0 = arith.constant 0 : i32
    %c0_i32_1 = arith.constant 0 : i32
    return %c0_i32, %c0_i32_0 : i32, i32
  }
  func.func @transform_7(%arg0: i32) -> (i32, i32) {
    %c0_i32 = arith.constant 0 : i32
    %c0_i32_0 = arith.constant 0 : i32
    return %arg0, %c0_i32 : i32, i32
  }
}

</mosaic_0001>

<llo_original>
// kernel: tpu_custom_call.1
$region0: #{tpu_custom_call.1}
  #allocation0 [shape = 'u32[]', space=smem, size = 0x4, offset = 0x4, fixed_abs, tag = 'smem constant byte address 0x4 - core index']
  #allocation1 [shape = 'u32[72,128]{1,0:T(1,128)}', space=vmem, size = 0x9000, scoped, tag = 'internal scratch']
  #allocation2 [shape = 'f32[1,1]{1,0:T(1,128)S(1)}', space=vmem, size = 0x200, scoped, tag = 'scoped memory for tpu_custom_call.1']
  %s0 = inlined_call_operand.hbm [shape: f32[2,8], index: 0, kind: input, shape index: {}]
  %s1 = inlined_call_operand.hbm [shape: f32[8,256], index: 1, kind: input, shape index: {}]
  %s2 = inlined_call_operand.hbm [shape: f32[1,256], index: 2, kind: input, shape index: {}]
  %s3 = inlined_call_operand.hbm [shape: f32[256,512], index: 3, kind: input, shape index: {}]
  %s4 = inlined_call_operand.vmem [shape: f32[1,512], index: 4, kind: input, shape index: {}]
  %s5 = inlined_call_operand.hbm [shape: f32[512,128], index: 5, kind: input, shape index: {}]
  %s6 = inlined_call_operand.<no memory space> [shape: f32[1,1], index: 6, kind: input, shape index: {}]
  %s7 = inlined_call_operand.vmem [shape: f32[2,1], index: 7, kind: output, shape index: {}]
  %s8 = sld [smem:[#allocation0]]
  $region88: #{tpu_custom_call.1} parent=0
    _
  %s10 = ssub.s32 1, %s8
  %s11 = scalar_select 0, %s10, %s8
  %v12 = vstv %s6
  %13 = vst [vmem:[#allocation2] sm:$0x1] %v12
  $region1: #{tpu_custom_call.1} parent=0
    #allocation3 [shape = 'u8[4096]{0}', space=vmem, size = 0x1000, scoped, tag = 'input window, operand 0, single buffered']
    #allocation4 [shape = 's32[1]{0}', space=sflag, size = 0x4, scoped, tag = 'scoped memory for tpu_custom_call.1']
    #allocation5 [shape = 'u8[8192]{0}', space=vmem, size = 0x2000, scoped, tag = 'input window, operand 1, single buffered']
    #allocation6 [shape = 's32[1]{0}', space=sflag, size = 0x4, scoped, tag = 'scoped memory for tpu_custom_call.1']
    #allocation7 [shape = 'u8[1024]{0}', space=vmem, size = 0x400, scoped, tag = 'input window, operand 2, single buffered']
    #allocation8 [shape = 'u8[524288]{0}', space=vmem, size = 0x80000, scoped, tag = 'input window, operand 3, single buffered']
    #allocation9 [shape = 's32[1]{0}', space=sflag, size = 0x4, scoped, tag = 'scoped memory for tpu_custom_call.1']
    #allocation10 [shape = 'u8[262144]{0}', space=vmem, size = 0x40000, scoped, tag = 'input window, operand 5, single buffered']
    #allocation11 [shape = 'u8[4096]{0}', space=vmem, size = 0x1000, scoped, tag = 'output window, operand 0, single buffered']
    %14 = vsyncpa [#allocation4], 0
    %15 = vsyncpa [#allocation6], 0
    %16 = vsyncpa [#allocation9], 0
    // Predicated region
    $region2: #{tpu_custom_call.1} parent=1 // pred_check
      _
    $region3: #{tpu_custom_call.1} parent=1 // pred_check_branch
      %18 = sbr.rel (0) target = $region5
    $region4: #{tpu_custom_call.1} parent=1 // pred_region
      %20 = vsyncadd [#allocation4], 96
      %s21 = sshll.u32 %s0, 4
      %s22 = int_to_ptr.hbm [resolvable:$true] %s21
      %s23 = sshll.u32 [#allocation3], 4
      %s24 = int_to_ptr.vmem [resolvable:$true] %s23
      %29 = dma.hbm_to_vmem [thread:$0]  %s22, 32, %s24, [#allocation4], 32, 32, 2
    $region5: #{tpu_custom_call.1} parent=1 // pred_fallthru
      _
    // Predicated region
    $region6: #{tpu_custom_call.1} parent=1 // pred_check
      _
    $region7: #{tpu_custom_call.1} parent=1 // pred_check_branch
      %31 = sbr.rel (0) target = $region9
    $region8: #{tpu_custom_call.1} parent=1 // pred_region
      %33 = vsyncadd [#allocation6], 0
      %s35 = sshll.u32 %s1, 4
      %s36 = int_to_ptr.hbm [resolvable:$true] %s35
      %s37 = sshll.u32 [#allocation5], 4
      %s38 = int_to_ptr.vmem [resolvable:$true] %s37
      %40 = dma.hbm_to_vmem [thread:$0]  %s36, 256, %s38, [#allocation6]
    $region9: #{tpu_custom_call.1} parent=1 // pred_fallthru
      _
    // Predicated region
    $region10: #{tpu_custom_call.1} parent=1 // pred_check
      _
    $region11: #{tpu_custom_call.1} parent=1 // pred_check_branch
      %42 = sbr.rel (0) target = $region13
    $region12: #{tpu_custom_call.1} parent=1 // pred_region
      %44 = vsyncadd [#allocation6], 0
      %s46 = sshll.u32 %s2, 4
      %s47 = int_to_ptr.hbm [resolvable:$true] %s46
      %s48 = sshll.u32 [#allocation7], 4
      %s49 = int_to_ptr.vmem [resolvable:$true] %s48
      %51 = dma.hbm_to_vmem [thread:$0]  %s47, 32, %s49, [#allocation6]
    $region13: #{tpu_custom_call.1} parent=1 // pred_fallthru
      _
    // Predicated region
    $region14: #{tpu_custom_call.1} parent=1 // pred_check
      _
    $region15: #{tpu_custom_call.1} parent=1 // pred_check_branch
      %53 = sbr.rel (0) target = $region17
    $region16: #{tpu_custom_call.1} parent=1 // pred_region
      %55 = vsyncadd [#allocation9], 0
      %s56 = sshll.u32 %s3, 4
      %s57 = int_to_ptr.hbm [resolvable:$true] %s56
      %s58 = sshll.u32 [#allocation8], 4
      %s59 = int_to_ptr.vmem [resolvable:$true] %s58
      %64 = dma.hbm_to_vmem [thread:$0]  %s57, 16384, %s59, [#allocation9], 512, 512, 32
    $region17: #{tpu_custom_call.1} parent=1 // pred_fallthru
      _
    // Predicated region
    $region18: #{tpu_custom_call.1} parent=1 // pred_check
      _
    $region19: #{tpu_custom_call.1} parent=1 // pred_check_branch
      %66 = sbr.rel (0) target = $region21
    $region20: #{tpu_custom_call.1} parent=1 // pred_region
      _
    $region21: #{tpu_custom_call.1} parent=1 // pred_fallthru
      _
    // Predicated region
    $region22: #{tpu_custom_call.1} parent=1 // pred_check
      _
    $region23: #{tpu_custom_call.1} parent=1 // pred_check_branch
      %68 = sbr.rel (0) target = $region25
    $region24: #{tpu_custom_call.1} parent=1 // pred_region
      %70 = vsyncadd [#allocation9], 0
      %s71 = sshll.u32 %s5, 4
      %s72 = int_to_ptr.hbm [resolvable:$true] %s71
      %s73 = sshll.u32 [#allocation10], 4
      %s74 = int_to_ptr.vmem [resolvable:$true] %s73
      %79 = dma.hbm_to_vmem [thread:$0]  %s72, 8192, %s74, [#allocation9], 128, 128, 8
    $region25: #{tpu_custom_call.1} parent=1 // pred_fallthru
      _
    // Predicated region
    $region26: #{tpu_custom_call.1} parent=1 // pred_check
      _
    $region27: #{tpu_custom_call.1} parent=1 // pred_check_branch
      %81 = sbr.rel (0) target = $region29
    $region28: #{tpu_custom_call.1} parent=1 // pred_region
      _
    $region29: #{tpu_custom_call.1} parent=1 // pred_fallthru
      _
    // Predicated region
    $region30: #{tpu_custom_call.1} parent=1 // pred_check
      _
    $region31: #{tpu_custom_call.1} parent=1 // pred_check_branch
      %83 = sbr.rel (0) target = $region33
    $region32: #{tpu_custom_call.1} parent=1 // pred_region
      %85 = dma.done [#allocation4], 128
    $region33: #{tpu_custom_call.1} parent=1 // pred_fallthru
      _
    // Predicated region
    $region34: #{tpu_custom_call.1} parent=1 // pred_check
      _
    $region35: #{tpu_custom_call.1} parent=1 // pred_check_branch
      %87 = sbr.rel (0) target = $region37
    $region36: #{tpu_custom_call.1} parent=1 // pred_region
      %89 = dma.done [#allocation6], 256
    $region37: #{tpu_custom_call.1} parent=1 // pred_fallthru
      _
    // Predicated region
    $region38: #{tpu_custom_call.1} parent=1 // pred_check
      _
    $region39: #{tpu_custom_call.1} parent=1 // pred_check_branch
      %91 = sbr.rel (0) target = $region41
    $region40: #{tpu_custom_call.1} parent=1 // pred_region
      %93 = dma.done [#allocation6], 32
    $region41: #{tpu_custom_call.1} parent=1 // pred_fallthru
      _
    // Predicated region
    $region42: #{tpu_custom_call.1} parent=1 // pred_check
      _
    $region43: #{tpu_custom_call.1} parent=1 // pred_check_branch
      %95 = sbr.rel (0) target = $region45
    $region44: #{tpu_custom_call.1} parent=1 // pred_region
      %97 = dma.done [#allocation9], 16384
    $region45: #{tpu_custom_call.1} parent=1 // pred_fallthru
      _
    // Predicated region
    $region46: #{tpu_custom_call.1} parent=1 // pred_check
      _
    $region47: #{tpu_custom_call.1} parent=1 // pred_check_branch
      %99 = sbr.rel (0) target = $region49
    $region48: #{tpu_custom_call.1} parent=1 // pred_region
      %101 = dma.done [#allocation9], 8192
    $region49: #{tpu_custom_call.1} parent=1 // pred_fallthru
      _
    %v102 = vld [vmem:[#allocation3] sm:$0xff]
    %v103 = vld [vmem:[#allocation5] sm:$0xff]
    %v104 = vld [vmem:[#allocation5 + $0x8] sm:$0xff]
    %v105 = vld [vmem:[#allocation7] sm:$0x3]
    %v107 = vperm.slane %v105, 0
    %v108 = vperm.slane %v105, 1
    %vm111 = vcmask 64512
    %v113 = vsel %vm111, %v102, 0
    %115 = vmatpush.msra.mxu0 0.0
    %116 = vmatpush.msra.mxu0 0.0
    %117 = vmatpush.msra.mxu0 0.0
    %118 = vmatpush.msra.mxu0 0.0
    %119 = vmatpush.msra.mxu0 0.0
    %120 = vmatpush.msra.mxu0 0.0
    %121 = vmatpush.msra.mxu0 0.0
    %122 = vmatpush.msra.mxu0 0.0
    %123 = vmatpush.msra.mxu0 0.0
    %124 = vmatpush.msra.mxu0 0.0
    %125 = vmatpush.msra.mxu0 0.0
    %126 = vmatpush.msra.mxu0 0.0
    %127 = vmatpush.msra.mxu0 0.0
    %128 = vmatpush.msra.mxu0 0.0
    %129 = vmatpush.msra.mxu0 0.0
    %130 = vmatpush.msra.mxu0 %v103
    %131 = vmatmul.f32.gmra.mxu0 %v113
    %v132 = vpop.f32.mrf.mxu0
    %v133 = vadd.f32 %v107, %v132
    %134 = vdwg.mxu0
    %135 = vmatpush.msra.mxu0 0.0
    %136 = vmatpush.msra.mxu0 0.0
    %137 = vmatpush.msra.mxu0 0.0
    %138 = vmatpush.msra.mxu0 0.0
    %139 = vmatpush.msra.mxu0 0.0
    %140 = vmatpush.msra.mxu0 0.0
    %141 = vmatpush.msra.mxu0 0.0
    %142 = vmatpush.msra.mxu0 0.0
    %143 = vmatpush.msra.mxu0 0.0
    %144 = vmatpush.msra.mxu0 0.0
    %145 = vmatpush.msra.mxu0 0.0
    %146 = vmatpush.msra.mxu0 0.0
    %147 = vmatpush.msra.mxu0 0.0
    %148 = vmatpush.msra.mxu0 0.0
    %149 = vmatpush.msra.mxu0 0.0
    %150 = vmatpush.msra.mxu0 %v104
    %151 = vmatmul.f32.gmra.mxu0 %v113
    %v152 = vpop.f32.mrf.mxu0
    %v153 = vadd.f32 %v108, %v152
    %154 = vdwg.mxu0
    %v155 = vmax.f32 %v133, 0.0
    %v156 = vmax.f32 %v153, 0.0
    %v157 = vld [vmem:[#allocation8] sm:$0xff]
    %v158 = vld [vmem:[#allocation8 + $0x8] sm:$0xff]
    %v159 = vld [vmem:[#allocation8 + $0x10] sm:$0xff]
    %v160 = vld [vmem:[#allocation8 + $0x18] sm:$0xff]
    %v161 = vld [vmem:[#allocation8 + $0x20] sm:$0xff]
    %v162 = vld [vmem:[#allocation8 + $0x28] sm:$0xff]
    %v163 = vld [vmem:[#allocation8 + $0x30] sm:$0xff]
    %v164 = vld [vmem:[#allocation8 + $0x38] sm:$0xff]
    %v165 = vld [vmem:[#allocation8 + $0x40] sm:$0xff]
    %v166 = vld [vmem:[#allocation8 + $0x48] sm:$0xff]
    %v167 = vld [vmem:[#allocation8 + $0x50] sm:$0xff]
    %v168 = vld [vmem:[#allocation8 + $0x58] sm:$0xff]
    %v169 = vld [vmem:[#allocation8 + $0x60] sm:$0xff]
    %v170 = vld [vmem:[#allocation8 + $0x68] sm:$0xff]
    %v171 = vld [vmem:[#allocation8 + $0x70] sm:$0xff]
    %v172 = vld [vmem:[#allocation8 + $0x78] sm:$0xff]
    %v173 = vld [vmem:[#allocation8 + $0x80] sm:$0xff]
    %v174 = vld [vmem:[#allocation8 + $0x88] sm:$0xff]
    %v175 = vld [vmem:[#allocation8 + $0x90] sm:$0xff]
    %v176 = vld [vmem:[#allocation8 + $0x98] sm:$0xff]
    %v177 = vld [vmem:[#allocation8 + $0xa0] sm:$0xff]
    %v178 = vld [vmem:[#allocation8 + $0xa8] sm:$0xff]
    %v179 = vld [vmem:[#allocation8 + $0xb0] sm:$0xff]
    %v180 = vld [vmem:[#allocation8 + $0xb8] sm:$0xff]
    %v181 = vld [vmem:[#allocation8 + $0xc0] sm:$0xff]
    %v182 = vld [vmem:[#allocation8 + $0xc8] sm:$0xff]
    %v183 = vld [vmem:[#allocation8 + $0xd0] sm:$0xff]
    %v184 = vld [vmem:[#allocation8 + $0xd8] sm:$0xff]
    %v185 = vld [vmem:[#allocation8 + $0xe0] sm:$0xff]
    %v186 = vld [vmem:[#allocation8 + $0xe8] sm:$0xff]
    %v187 = vld [vmem:[#allocation8 + $0xf0] sm:$0xff]
    %v188 = vld [vmem:[#allocation8 + $0xf8] sm:$0xff]
    %v189 = vld [vmem:[#allocation8 + $0x100] sm:$0xff]
    %v190 = vld [vmem:[#allocation8 + $0x108] sm:$0xff]
    %v191 = vld [vmem:[#allocation8 + $0x110] sm:$0xff]
    %v192 = vld [vmem:[#allocation8 + $0x118] sm:$0xff]
    %v193 = vld [vmem:[#allocation8 + $0x120] sm:$0xff]
    %v194 = vld [vmem:[#allocation8 + $0x128] sm:$0xff]
    %v195 = vld [vmem:[#allocation8 + $0x130] sm:$0xff]
    %v196 = vld [vmem:[#allocation8 + $0x138] sm:$0xff]
    %v197 = vld [vmem:[#allocation8 + $0x140] sm:$0xff]
    %v198 = vld [vmem:[#allocation8 + $0x148] sm:$0xff]
    %v199 = vld [vmem:[#allocation8 + $0x150] sm:$0xff]
    %v200 = vld [vmem:[#allocation8 + $0x158] sm:$0xff]
    %v201 = vld [vmem:[#allocation8 + $0x160] sm:$0xff]
    %v202 = vld [vmem:[#allocation8 + $0x168] sm:$0xff]
    %v203 = vld [vmem:[#allocation8 + $0x170] sm:$0xff]
    %v204 = vld [vmem:[#allocation8 + $0x178] sm:$0xff]
    %v205 = vld [vmem:[#allocation8 + $0x180] sm:$0xff]
    %v206 = vld [vmem:[#allocation8 + $0x188] sm:$0xff]
    %v207 = vld [vmem:[#allocation8 + $0x190] sm:$0xff]
    %v208 = vld [vmem:[#allocation8 + $0x198] sm:$0xff]
    %v209 = vld [vmem:[#allocation8 + $0x1a0] sm:$0xff]
    %v210 = vld [vmem:[#allocation8 + $0x1a8] sm:$0xff]
    %v211 = vld [vmem:[#allocation8 + $0x1b0] sm:$0xff]
    %v212 = vld [vmem:[#allocation8 + $0x1b8] sm:$0xff]
    %v213 = vld [vmem:[#allocation8 + $0x1c0] sm:$0xff]
    %v214 = vld [vmem:[#allocation8 + $0x1c8] sm:$0xff]
    %v215 = vld [vmem:[#allocation8 + $0x1d0] sm:$0xff]
    %v216 = vld [vmem:[#allocation8 + $0x1d8] sm:$0xff]
    %v217 = vld [vmem:[#allocation8 + $0x1e0] sm:$0xff]
    %v218 = vld [vmem:[#allocation8 + $0x1e8] sm:$0xff]
    %v219 = vld [vmem:[#allocation8 + $0x1f0] sm:$0xff]
    %v220 = vld [vmem:[#allocation8 + $0x1f8] sm:$0xff]
    %v221 = vld [vmem:[#allocation8 + $0x200] sm:$0xff]
    %v222 = vld [vmem:[#allocation8 + $0x208] sm:$0xff]
    %v223 = vld [vmem:[#allocation8 + $0x210] sm:$0xff]
    %v224 = vld [vmem:[#allocation8 + $0x218] sm:$0xff]
    %v225 = vld [vmem:[#allocation8 + $0x220] sm:$0xff]
    %v226 = vld [vmem:[#allocation8 + $0x228] sm:$0xff]
    %v227 = vld [vmem:[#allocation8 + $0x230] sm:$0xff]
    %v228 = vld [vmem:[#allocation8 + $0x238] sm:$0xff]
    %v229 = vld [vmem:[#allocation8 + $0x240] sm:$0xff]
    %v230 = vld [vmem:[#allocation8 + $0x248] sm:$0xff]
    %v231 = vld [vmem:[#allocation8 + $0x250] sm:$0xff]
    %v232 = vld [vmem:[#allocation8 + $0x258] sm:$0xff]
    %v233 = vld [vmem:[#allocation8 + $0x260] sm:$0xff]
    %v234 = vld [vmem:[#allocation8 + $0x268] sm:$0xff]
    %v235 = vld [vmem:[#allocation8 + $0x270] sm:$0xff]
    %v236 = vld [vmem:[#allocation8 + $0x278] sm:$0xff]
    %v237 = vld [vmem:[#allocation8 + $0x280] sm:$0xff]
    %v238 = vld [vmem:[#allocation8 + $0x288] sm:$0xff]
    %v239 = vld [vmem:[#allocation8 + $0x290] sm:$0xff]
    %v240 = vld [vmem:[#allocation8 + $0x298] sm:$0xff]
    %v241 = vld [vmem:[#allocation8 + $0x2a0] sm:$0xff]
    %v242 = vld [vmem:[#allocation8 + $0x2a8] sm:$0xff]
    %v243 = vld [vmem:[#allocation8 + $0x2b0] sm:$0xff]
    %v244 = vld [vmem:[#allocation8 + $0x2b8] sm:$0xff]
    %v245 = vld [vmem:[#allocation8 + $0x2c0] sm:$0xff]
    %v246 = vld [vmem:[#allocation8 + $0x2c8] sm:$0xff]
    %v247 = vld [vmem:[#allocation8 + $0x2d0] sm:$0xff]
    %v248 = vld [vmem:[#allocation8 + $0x2d8] sm:$0xff]
    %v249 = vld [vmem:[#allocation8 + $0x2e0] sm:$0xff]
    %v250 = vld [vmem:[#allocation8 + $0x2e8] sm:$0xff]
    %v251 = vld [vmem:[#allocation8 + $0x2f0] sm:$0xff]
    %v252 = vld [vmem:[#allocation8 + $0x2f8] sm:$0xff]
    %v253 = vld [vmem:[#allocation8 + $0x300] sm:$0xff]
    %v254 = vld [vmem:[#allocation8 + $0x308] sm:$0xff]
    %v255 = vld [vmem:[#allocation8 + $0x310] sm:$0xff]
    %v256 = vld [vmem:[#allocation8 + $0x318] sm:$0xff]
    %v257 = vld [vmem:[#allocation8 + $0x320] sm:$0xff]
    %v258 = vld [vmem:[#allocation8 + $0x328] sm:$0xff]
    %v259 = vld [vmem:[#allocation8 + $0x330] sm:$0xff]
    %v260 = vld [vmem:[#allocation8 + $0x338] sm:$0xff]
    %v261 = vld [vmem:[#allocation8 + $0x340] sm:$0xff]
    %v262 = vld [vmem:[#allocation8 + $0x348] sm:$0xff]
    %v263 = vld [vmem:[#allocation8 + $0x350] sm:$0xff]
    %v264 = vld [vmem:[#allocation8 + $0x358] sm:$0xff]
    %v265 = vld [vmem:[#allocation8 + $0x360] sm:$0xff]
    %v266 = vld [vmem:[#allocation8 + $0x368] sm:$0xff]
    %v267 = vld [vmem:[#allocation8 + $0x370] sm:$0xff]
    %v268 = vld [vmem:[#allocation8 + $0x378] sm:$0xff]
    %v269 = vld [vmem:[#allocation8 + $0x380] sm:$0xff]
    %v270 = vld [vmem:[#allocation8 + $0x388] sm:$0xff]
    %v271 = vld [vmem:[#allocation8 + $0x390] sm:$0xff]
    %v272 = vld [vmem:[#allocation8 + $0x398] sm:$0xff]
    %v273 = vld [vmem:[#allocation8 + $0x3a0] sm:$0xff]
    %v274 = vld [vmem:[#allocation8 + $0x3a8] sm:$0xff]
    %v275 = vld [vmem:[#allocation8 + $0x3b0] sm:$0xff]
    %v276 = vld [vmem:[#allocation8 + $0x3b8] sm:$0xff]
    %v277 = vld [vmem:[#allocation8 + $0x3c0] sm:$0xff]
    %v278 = vld [vmem:[#allocation8 + $0x3c8] sm:$0xff]
    %v279 = vld [vmem:[#allocation8 + $0x3d0] sm:$0xff]
    %v280 = vld [vmem:[#allocation8 + $0x3d8] sm:$0xff]
    %v281 = vld [vmem:[#allocation8 + $0x3e0] sm:$0xff]
    %v282 = vld [vmem:[#allocation8 + $0x3e8] sm:$0xff]
    %v283 = vld [vmem:[#allocation8 + $0x3f0] sm:$0xff]
    %v284 = vld [vmem:[#allocation8 + $0x3f8] sm:$0xff]
    %v285 = vld [vmem:[%s4] sm:$0xf]
    %v287 = vperm.slane %v285, 0
    %v288 = vperm.slane %v285, 1
    %v289 = vperm.slane %v285, 2
    %v290 = vperm.slane %v285, 3
    %295 = vmatpush.msra.mxu0 %v217
    %296 = vmatpush.msra.mxu0 %v213
    %297 = vmatpush.msra.mxu0 %v209
    %298 = vmatpush.msra.mxu0 %v205
    %299 = vmatpush.msra.mxu0 %v201
    %300 = vmatpush.msra.mxu0 %v197
    %301 = vmatpush.msra.mxu0 %v193
    %302 = vmatpush.msra.mxu0 %v189
    %303 = vmatpush.msra.mxu0 %v185
    %304 = vmatpush.msra.mxu0 %v181
    %305 = vmatpush.msra.mxu0 %v177
    %306 = vmatpush.msra.mxu0 %v173
    %307 = vmatpush.msra.mxu0 %v169
    %308 = vmatpush.msra.mxu0 %v165
    %309 = vmatpush.msra.mxu0 %v161
    %310 = vmatpush.msra.mxu0 %v157
    %311 = vmatmul.f32.gmra.mxu0 %v155
    %v312 = vpop.f32.mrf.mxu0
    %v313 = vadd.f32 %v287, %v312
    %314 = vdwg.mxu0
    %315 = vmatpush.msra.mxu0 %v281
    %316 = vmatpush.msra.mxu0 %v277
    %317 = vmatpush.msra.mxu0 %v273
    %318 = vmatpush.msra.mxu0 %v269
    %319 = vmatpush.msra.mxu0 %v265
    %320 = vmatpush.msra.mxu0 %v261
    %321 = vmatpush.msra.mxu0 %v257
    %322 = vmatpush.msra.mxu0 %v253
    %323 = vmatpush.msra.mxu0 %v249
    %324 = vmatpush.msra.mxu0 %v245
    %325 = vmatpush.msra.mxu0 %v241
    %326 = vmatpush.msra.mxu0 %v237
    %327 = vmatpush.msra.mxu0 %v233
    %328 = vmatpush.msra.mxu0 %v229
    %329 = vmatpush.msra.mxu0 %v225
    %330 = vmatpush.msra.mxu0 %v221
    %331 = vmatmul.f32.gmra.mxu0 %v156
    %v332 = vpop.f32.mrf.mxu0
    %v333 = vadd.f32 %v313, %v332
    %334 = vdwg.mxu0
    %335 = vmatpush.msra.mxu0 %v218
    %336 = vmatpush.msra.mxu0 %v214
    %337 = vmatpush.msra.mxu0 %v210
    %338 = vmatpush.msra.mxu0 %v206
    %339 = vmatpush.msra.mxu0 %v202
    %340 = vmatpush.msra.mxu0 %v198
    %341 = vmatpush.msra.mxu0 %v194
    %342 = vmatpush.msra.mxu0 %v190
    %343 = vmatpush.msra.mxu0 %v186
    %344 = vmatpush.msra.mxu0 %v182
    %345 = vmatpush.msra.mxu0 %v178
    %346 = vmatpush.msra.mxu0 %v174
    %347 = vmatpush.msra.mxu0 %v170
    %348 = vmatpush.msra.mxu0 %v166
    %349 = vmatpush.msra.mxu0 %v162
    %350 = vmatpush.msra.mxu0 %v158
    %351 = vmatmul.f32.gmra.mxu0 %v155
    %v352 = vpop.f32.mrf.mxu0
    %v353 = vadd.f32 %v288, %v352
    %354 = vdwg.mxu0
    %355 = vmatpush.msra.mxu0 %v282
    %356 = vmatpush.msra.mxu0 %v278
    %357 = vmatpush.msra.mxu0 %v274
    %358 = vmatpush.msra.mxu0 %v270
    %359 = vmatpush.msra.mxu0 %v266
    %360 = vmatpush.msra.mxu0 %v262
    %361 = vmatpush.msra.mxu0 %v258
    %362 = vmatpush.msra.mxu0 %v254
    %363 = vmatpush.msra.mxu0 %v250
    %364 = vmatpush.msra.mxu0 %v246
    %365 = vmatpush.msra.mxu0 %v242
    %366 = vmatpush.msra.mxu0 %v238
    %367 = vmatpush.msra.mxu0 %v234
    %368 = vmatpush.msra.mxu0 %v230
    %369 = vmatpush.msra.mxu0 %v226
    %370 = vmatpush.msra.mxu0 %v222
    %371 = vmatmul.f32.gmra.mxu0 %v156
    %v372 = vpop.f32.mrf.mxu0
    %v373 = vadd.f32 %v353, %v372
    %374 = vdwg.mxu0
    %375 = vmatpush.msra.mxu0 %v219
    %376 = vmatpush.msra.mxu0 %v215
    %377 = vmatpush.msra.mxu0 %v211
    %378 = vmatpush.msra.mxu0 %v207
    %379 = vmatpush.msra.mxu0 %v203
    %380 = vmatpush.msra.mxu0 %v199
    %381 = vmatpush.msra.mxu0 %v195
    %382 = vmatpush.msra.mxu0 %v191
    %383 = vmatpush.msra.mxu0 %v187
    %384 = vmatpush.msra.mxu0 %v183
    %385 = vmatpush.msra.mxu0 %v179
    %386 = vmatpush.msra.mxu0 %v175
    %387 = vmatpush.msra.mxu0 %v171
    %388 = vmatpush.msra.mxu0 %v167
    %389 = vmatpush.msra.mxu0 %v163
    %390 = vmatpush.msra.mxu0 %v159
    %391 = vmatmul.f32.gmra.mxu0 %v155
    %v392 = vpop.f32.mrf.mxu0
    %v393 = vadd.f32 %v289, %v392
    %394 = vdwg.mxu0
    %395 = vmatpush.msra.mxu0 %v283
    %396 = vmatpush.msra.mxu0 %v279
    %397 = vmatpush.msra.mxu0 %v275
    %398 = vmatpush.msra.mxu0 %v271
    %399 = vmatpush.msra.mxu0 %v267
    %400 = vmatpush.msra.mxu0 %v263
    %401 = vmatpush.msra.mxu0 %v259
    %402 = vmatpush.msra.mxu0 %v255
    %403 = vmatpush.msra.mxu0 %v251
    %404 = vmatpush.msra.mxu0 %v247
    %405 = vmatpush.msra.mxu0 %v243
    %406 = vmatpush.msra.mxu0 %v239
    %407 = vmatpush.msra.mxu0 %v235
    %408 = vmatpush.msra.mxu0 %v231
    %409 = vmatpush.msra.mxu0 %v227
    %410 = vmatpush.msra.mxu0 %v223
    %411 = vmatmul.f32.gmra.mxu0 %v156
    %v412 = vpop.f32.mrf.mxu0
    %v413 = vadd.f32 %v393, %v412
    %414 = vdwg.mxu0
    %415 = vmatpush.msra.mxu0 %v220
    %416 = vmatpush.msra.mxu0 %v216
    %417 = vmatpush.msra.mxu0 %v212
    %418 = vmatpush.msra.mxu0 %v208
    %419 = vmatpush.msra.mxu0 %v204
    %420 = vmatpush.msra.mxu0 %v200
    %421 = vmatpush.msra.mxu0 %v196
    %422 = vmatpush.msra.mxu0 %v192
    %423 = vmatpush.msra.mxu0 %v188
    %424 = vmatpush.msra.mxu0 %v184
    %425 = vmatpush.msra.mxu0 %v180
    %426 = vmatpush.msra.mxu0 %v176
    %427 = vmatpush.msra.mxu0 %v172
    %428 = vmatpush.msra.mxu0 %v168
    %429 = vmatpush.msra.mxu0 %v164
    %430 = vmatpush.msra.mxu0 %v160
    %431 = vmatmul.f32.gmra.mxu0 %v155
    %v432 = vpop.f32.mrf.mxu0
    %v433 = vadd.f32 %v290, %v432
    %434 = vdwg.mxu0
    %435 = vmatpush.msra.mxu0 %v284
    %436 = vmatpush.msra.mxu0 %v280
    %437 = vmatpush.msra.mxu0 %v276
    %438 = vmatpush.msra.mxu0 %v272
    %439 = vmatpush.msra.mxu0 %v268
    %440 = vmatpush.msra.mxu0 %v264
    %441 = vmatpush.msra.mxu0 %v260
    %442 = vmatpush.msra.mxu0 %v256
    %443 = vmatpush.msra.mxu0 %v252
    %444 = vmatpush.msra.mxu0 %v248
    %445 = vmatpush.msra.mxu0 %v244
    %446 = vmatpush.msra.mxu0 %v240
    %447 = vmatpush.msra.mxu0 %v236
    %448 = vmatpush.msra.mxu0 %v232
    %449 = vmatpush.msra.mxu0 %v228
    %450 = vmatpush.msra.mxu0 %v224
    %451 = vmatmul.f32.gmra.mxu0 %v156
    %v452 = vpop.f32.mrf.mxu0
    %v453 = vadd.f32 %v433, %v452
    %454 = vdwg.mxu0
    %v455 = vmax.f32 %v333, 0.0
    %v456 = vmax.f32 %v373, 0.0
    %v457 = vmax.f32 %v413, 0.0
    %v458 = vmax.f32 %v453, 0.0
    %v459 = vld [vmem:[#allocation10] sm:$0xff]
    %v460 = vld [vmem:[#allocation10 + $0x8] sm:$0xff]
    %v461 = vld [vmem:[#allocation10 + $0x10] sm:$0xff]
    %v462 = vld [vmem:[#allocation10 + $0x18] sm:$0xff]
    %v463 = vld [vmem:[#allocation10 + $0x20] sm:$0xff]
    %v464 = vld [vmem:[#allocation10 + $0x28] sm:$0xff]
    %v465 = vld [vmem:[#allocation10 + $0x30] sm:$0xff]
    %v466 = vld [vmem:[#allocation10 + $0x38] sm:$0xff]
    %v467 = vld [vmem:[#allocation10 + $0x40] sm:$0xff]
    %v468 = vld [vmem:[#allocation10 + $0x48] sm:$0xff]
    %v469 = vld [vmem:[#allocation10 + $0x50] sm:$0xff]
    %v470 = vld [vmem:[#allocation10 + $0x58] sm:$0xff]
    %v471 = vld [vmem:[#allocation10 + $0x60] sm:$0xff]
    %v472 = vld [vmem:[#allocation10 + $0x68] sm:$0xff]
    %v473 = vld [vmem:[#allocation10 + $0x70] sm:$0xff]
    %v474 = vld [vmem:[#allocation10 + $0x78] sm:$0xff]
    %v475 = vld [vmem:[#allocation10 + $0x80] sm:$0xff]
    %v476 = vld [vmem:[#allocation10 + $0x88] sm:$0xff]
    %v477 = vld [vmem:[#allocation10 + $0x90] sm:$0xff]
    %v478 = vld [vmem:[#allocation10 + $0x98] sm:$0xff]
    %v479 = vld [vmem:[#allocation10 + $0xa0] sm:$0xff]
    %v480 = vld [vmem:[#allocation10 + $0xa8] sm:$0xff]
    %v481 = vld [vmem:[#allocation10 + $0xb0] sm:$0xff]
    %v482 = vld [vmem:[#allocation10 + $0xb8] sm:$0xff]
    %v483 = vld [vmem:[#allocation10 + $0xc0] sm:$0xff]
    %v484 = vld [vmem:[#allocation10 + $0xc8] sm:$0xff]
    %v485 = vld [vmem:[#allocation10 + $0xd0] sm:$0xff]
    %v486 = vld [vmem:[#allocation10 + $0xd8] sm:$0xff]
    %v487 = vld [vmem:[#allocation10 + $0xe0] sm:$0xff]
    %v488 = vld [vmem:[#allocation10 + $0xe8] sm:$0xff]
    %v489 = vld [vmem:[#allocation10 + $0xf0] sm:$0xff]
    %v490 = vld [vmem:[#allocation10 + $0xf8] sm:$0xff]
    %v491 = vld [vmem:[#allocation10 + $0x100] sm:$0xff]
    %v492 = vld [vmem:[#allocation10 + $0x108] sm:$0xff]
    %v493 = vld [vmem:[#allocation10 + $0x110] sm:$0xff]
    %v494 = vld [vmem:[#allocation10 + $0x118] sm:$0xff]
    %v495 = vld [vmem:[#allocation10 + $0x120] sm:$0xff]
    %v496 = vld [vmem:[#allocation10 + $0x128] sm:$0xff]
    %v497 = vld [vmem:[#allocation10 + $0x130] sm:$0xff]
    %v498 = vld [vmem:[#allocation10 + $0x138] sm:$0xff]
    %v499 = vld [vmem:[#allocation10 + $0x140] sm:$0xff]
    %v500 = vld [vmem:[#allocation10 + $0x148] sm:$0xff]
    %v501 = vld [vmem:[#allocation10 + $0x150] sm:$0xff]
    %v502 = vld [vmem:[#allocation10 + $0x158] sm:$0xff]
    %v503 = vld [vmem:[#allocation10 + $0x160] sm:$0xff]
    %v504 = vld [vmem:[#allocation10 + $0x168] sm:$0xff]
    %v505 = vld [vmem:[#allocation10 + $0x170] sm:$0xff]
    %v506 = vld [vmem:[#allocation10 + $0x178] sm:$0xff]
    %v507 = vld [vmem:[#allocation10 + $0x180] sm:$0xff]
    %v508 = vld [vmem:[#allocation10 + $0x188] sm:$0xff]
    %v509 = vld [vmem:[#allocation10 + $0x190] sm:$0xff]
    %v510 = vld [vmem:[#allocation10 + $0x198] sm:$0xff]
    %v511 = vld [vmem:[#allocation10 + $0x1a0] sm:$0xff]
    %v512 = vld [vmem:[#allocation10 + $0x1a8] sm:$0xff]
    %v513 = vld [vmem:[#allocation10 + $0x1b0] sm:$0xff]
    %v514 = vld [vmem:[#allocation10 + $0x1b8] sm:$0xff]
    %v515 = vld [vmem:[#allocation10 + $0x1c0] sm:$0xff]
    %v516 = vld [vmem:[#allocation10 + $0x1c8] sm:$0xff]
    %v517 = vld [vmem:[#allocation10 + $0x1d0] sm:$0xff]
    %v518 = vld [vmem:[#allocation10 + $0x1d8] sm:$0xff]
    %v519 = vld [vmem:[#allocation10 + $0x1e0] sm:$0xff]
    %v520 = vld [vmem:[#allocation10 + $0x1e8] sm:$0xff]
    %v521 = vld [vmem:[#allocation10 + $0x1f0] sm:$0xff]
    %v522 = vld [vmem:[#allocation10 + $0x1f8] sm:$0xff]
    %523 = vmatpush.msra.mxu0 %v474
    %524 = vmatpush.msra.mxu0 %v473
    %525 = vmatpush.msra.mxu0 %v472
    %526 = vmatpush.msra.mxu0 %v471
    %527 = vmatpush.msra.mxu0 %v470
    %528 = vmatpush.msra.mxu0 %v469
    %529 = vmatpush.msra.mxu0 %v468
    %530 = vmatpush.msra.mxu0 %v467
    %531 = vmatpush.msra.mxu0 %v466
    %532 = vmatpush.msra.mxu0 %v465
    %533 = vmatpush.msra.mxu0 %v464
    %534 = vmatpush.msra.mxu0 %v463
    %535 = vmatpush.msra.mxu0 %v462
    %536 = vmatpush.msra.mxu0 %v461
    %537 = vmatpush.msra.mxu0 %v460
    %538 = vmatpush.msra.mxu0 %v459
    %539 = vmatmul.f32.gmra.mxu0 %v455
    %v540 = vpop.f32.mrf.mxu0
    %v541 = vadd.f32 0.0, %v540
    %542 = vdwg.mxu0
    %543 = vmatpush.msra.mxu0 %v490
    %544 = vmatpush.msra.mxu0 %v489
    %545 = vmatpush.msra.mxu0 %v488
    %546 = vmatpush.msra.mxu0 %v487
    %547 = vmatpush.msra.mxu0 %v486
    %548 = vmatpush.msra.mxu0 %v485
    %549 = vmatpush.msra.mxu0 %v484
    %550 = vmatpush.msra.mxu0 %v483
    %551 = vmatpush.msra.mxu0 %v482
    %552 = vmatpush.msra.mxu0 %v481
    %553 = vmatpush.msra.mxu0 %v480
    %554 = vmatpush.msra.mxu0 %v479
    %555 = vmatpush.msra.mxu0 %v478
    %556 = vmatpush.msra.mxu0 %v477
    %557 = vmatpush.msra.mxu0 %v476
    %558 = vmatpush.msra.mxu0 %v475
    %559 = vmatmul.f32.gmra.mxu0 %v456
    %v560 = vpop.f32.mrf.mxu0
    %v561 = vadd.f32 %v541, %v560
    %562 = vdwg.mxu0
    %563 = vmatpush.msra.mxu0 %v506
    %564 = vmatpush.msra.mxu0 %v505
    %565 = vmatpush.msra.mxu0 %v504
    %566 = vmatpush.msra.mxu0 %v503
    %567 = vmatpush.msra.mxu0 %v502
    %568 = vmatpush.msra.mxu0 %v501
    %569 = vmatpush.msra.mxu0 %v500
    %570 = vmatpush.msra.mxu0 %v499
    %571 = vmatpush.msra.mxu0 %v498
    %572 = vmatpush.msra.mxu0 %v497
    %573 = vmatpush.msra.mxu0 %v496
    %574 = vmatpush.msra.mxu0 %v495
    %575 = vmatpush.msra.mxu0 %v494
    %576 = vmatpush.msra.mxu0 %v493
    %577 = vmatpush.msra.mxu0 %v492
    %578 = vmatpush.msra.mxu0 %v491
    %579 = vmatmul.f32.gmra.mxu0 %v457
    %v580 = vpop.f32.mrf.mxu0
    %v581 = vadd.f32 %v561, %v580
    %582 = vdwg.mxu0
    %583 = vmatpush.msra.mxu0 %v522
    %584 = vmatpush.msra.mxu0 %v521
    %585 = vmatpush.msra.mxu0 %v520
    %586 = vmatpush.msra.mxu0 %v519
    %587 = vmatpush.msra.mxu0 %v518
    %588 = vmatpush.msra.mxu0 %v517
    %589 = vmatpush.msra.mxu0 %v516
    %590 = vmatpush.msra.mxu0 %v515
    %591 = vmatpush.msra.mxu0 %v514
    %592 = vmatpush.msra.mxu0 %v513
    %593 = vmatpush.msra.mxu0 %v512
    %594 = vmatpush.msra.mxu0 %v511
    %595 = vmatpush.msra.mxu0 %v510
    %596 = vmatpush.msra.mxu0 %v509
    %597 = vmatpush.msra.mxu0 %v508
    %598 = vmatpush.msra.mxu0 %v507
    %599 = vmatmul.f32.gmra.mxu0 %v458
    %v600 = vpop.f32.mrf.mxu0
    %v601 = vadd.f32 %v581, %v600
    %602 = vdwg.mxu0
    %v603 = vld [vmem:[#allocation2] sm:$0x1]
    %v605 = vperm.slane %v603, 0
    %v607 = vadd.f32 %v601, %v605
    %vm608 = vcmask 7168
    %609 = vst.msk [vmem:[#allocation11] sm:$0xff] %vm608, %v607
    // Predicated region
    $region50: #{tpu_custom_call.1} parent=1 // pred_check
      _
    $region51: #{tpu_custom_call.1} parent=1 // pred_check_branch
      %611 = sbr.rel (0) target = $region53
    $region52: #{tpu_custom_call.1} parent=1 // pred_region
      // Predicated region
      $region54: #{tpu_custom_call.1} parent=52 // pred_check
        _
      $region55: #{tpu_custom_call.1} parent=52 // pred_check_branch
        %613 = sbr.rel (0) target = $region57
      $region56: #{tpu_custom_call.1} parent=52 // pred_region
        // Predicated region
        $region58: #{tpu_custom_call.1} parent=56 // pred_check
          _
        $region59: #{tpu_custom_call.1} parent=56 // pred_check_branch
          %615 = sbr.rel target = $region61
        $region60: #{tpu_custom_call.1} parent=56 // pred_region
          // Predicated region
          $region73: #{tpu_custom_call.1} parent=60 // pred_check
            _
          $region74: #{tpu_custom_call.1} parent=60 // pred_check_branch
            %631 = sbr.rel (0) target = $region76
          $region75: #{tpu_custom_call.1} parent=60 // pred_region
            %s633 = ssub.s32 4, 1
            loop: start=0, step=1, limit=1
            $region77: #{tpu_custom_call.1} parent=75 // loop_pre_header
              _
            $region78: #{tpu_custom_call.1} parent=75 // loop_header
              %s635 = sphi 0, %s639
              %p636 = scmp.ge.s32.totalorder %s635, 1
              %s640 = sphi [#allocation11], [#allocation11]
              %s641 = sphi %s7, %s7
            $region79: #{tpu_custom_call.1} parent=75 // loop_header_branch
              %638 = sbr.rel (%p636) target = $region83
            $region80: #{tpu_custom_call.1} parent=75 // loop_body
              %v642 = vld [vmem:[%s640] sm:%s633]
              %643 = vst [vmem:[%s641] sm:%s633] %v642
            $region81: #{tpu_custom_call.1} parent=75 // loop_footer
              %s639 = sadd.s32 1, %s635
            $region82: #{tpu_custom_call.1} parent=75 // loop_footer_branch
              %634 = sbr.rel target = $region78
            $region83: #{tpu_custom_call.1} parent=75 // loop_exit
              _
          $region76: #{tpu_custom_call.1} parent=60 // pred_fallthru
            _
        $region61: #{tpu_custom_call.1} parent=56 // pred_fallthru
          _
        // Predicated region
        $region62: #{tpu_custom_call.1} parent=56 // pred_check
          _
        $region63: #{tpu_custom_call.1} parent=56 // pred_check_branch
          %617 = sbr.rel (0) target = $region65
        $region64: #{tpu_custom_call.1} parent=56 // pred_region
          %s619 = ssub.s32 4, 1
          loop: start=0, step=1, limit=1
          $region66: #{tpu_custom_call.1} parent=64 // loop_pre_header
            _
          $region67: #{tpu_custom_call.1} parent=64 // loop_header
            %s621 = sphi 0, %s625
            %p622 = scmp.ge.s32.totalorder %s621, 1
            %s626 = sphi [#allocation11], [#allocation11]
            %s627 = sphi %s7, %s7
          $region68: #{tpu_custom_call.1} parent=64 // loop_header_branch
            %624 = sbr.rel (%p622) target = $region72
          $region69: #{tpu_custom_call.1} parent=64 // loop_body
            %v628 = vld [vmem:[%s626] sm:%s619]
            %629 = vst [vmem:[%s627] sm:%s619] %v628
          $region70: #{tpu_custom_call.1} parent=64 // loop_footer
            %s625 = sadd.s32 1, %s621
          $region71: #{tpu_custom_call.1} parent=64 // loop_footer_branch
            %620 = sbr.rel target = $region67
          $region72: #{tpu_custom_call.1} parent=64 // loop_exit
            _
        $region65: #{tpu_custom_call.1} parent=56 // pred_fallthru
          _
      $region57: #{tpu_custom_call.1} parent=52 // pred_fallthru
        _
      %644 = vnop
    $region53: #{tpu_custom_call.1} parent=1 // pred_fallthru
      _
    // Predicated region
    $region84: #{tpu_custom_call.1} parent=1 // pred_check
      _
    $region85: #{tpu_custom_call.1} parent=1 // pred_check_branch
      %646 = sbr.rel (0) target = $region87
    $region86: #{tpu_custom_call.1} parent=1 // pred_region
      _
    $region87: #{tpu_custom_call.1} parent=1 // pred_fallthru
      _
    %647 = vsyncpa [#allocation4], 1
    %648 = vsyncpa [#allocation6], 1
    %649 = vsyncpa [#allocation9], 1

</llo_original>
